<compile_context>
chip_gen: v7x
topology: tpu7x:2x2x1
jax: 0.10.0
libtpu: 0.0.40
codegen_flags: <defaults>
</compile_context>

<pallas_src>
import functools

import jax
import jax.numpy as jnp
from jax.experimental import pallas as pl
from jax.experimental.pallas import tpu as pltpu


def _autoencoder_kernel(x_ref, w_ref, s_ref, o_ref, *, co, nb, n_layers,
                        compute_dtype):
    """Fused 6x (1x1 conv -> folded BN -> ReLU) chain on an (nb, Cp, T) block."""
    for b in range(nb):                                    # short static unroll
        h = x_ref[b].astype(jnp.float32)                   # (Cp, T)
        for li in range(n_layers):
            # 1x1 conv with BN-scale folded into W: (Cp,Cp) @ (Cp,T) on the MXU.
            # Operands in compute_dtype (bf16 by default -> single MXU pass),
            # accumulation, shift add and ReLU stay in f32.
            y = jnp.dot(w_ref[li].astype(compute_dtype),
                        h.astype(compute_dtype),
                        preferred_element_type=jnp.float32)
            y = y + s_ref[li]                              # (Cp,1) broadcast add
            if li < n_layers - 1:                          # no ReLU after last BN
                y = jnp.maximum(y, 0.0)
            h = y
        o_ref[b] = h[:co].astype(o_ref.dtype)


def _choose_tiles(n, hw, cpad, itemsize, *, target_bytes, max_tile_hw,
                  min_grid_steps=2, max_batch_block=8):
    """Pick (images-per-block, lane-tile) for grid = (n // nb, cdiv(hw, tile_hw))."""
    # Largest lane tile (multiple of 128, or the full HW) within the byte budget.
    lane_cap = min(max_tile_hw, max(128, target_bytes // (cpad * itemsize)))
    lane_cap = (lane_cap // 128) * 128
    if hw <= lane_cap:
        tile_hw = hw                                 # whole image: contiguous DMA
    else:
        tile_hw = lane_cap
        for cand in range(lane_cap, 127, -128):      # prefer a divisor: no tail
            if hw % cand == 0:
                tile_hw = cand
                break
    n_hw = pl.cdiv(hw, tile_hw)

    # Pack whole images per block when HW is small: one big contiguous slab per
    # DMA, fewer grid steps.  Keep >= 2 grid steps (both v7x TensorCores) when
    # the problem allows it, and cap the in-kernel unroll.
    nb = 1
    if n_hw == 1:
        blk_bytes = cpad * tile_hw * itemsize
        for cand in range(min(n, max_batch_block), 0, -1):
            if n % cand:                             # keep batch blocks exact
                continue
            if cand * blk_bytes > target_bytes:
                continue
            if (n // cand) * n_hw < min_grid_steps and n * n_hw >= min_grid_steps:
                continue                             # would idle a v7x core
            nb = cand
            break

    # v7x: if the whole problem would be a single grid step, split HW in two.
    if (n // nb) * n_hw < min_grid_steps and n_hw == 1 and tile_hw >= 2 * 128:
        tile_hw = pl.cdiv(pl.cdiv(hw, 2), 128) * 128

    return nb, tile_hw


def make_raw_params(key, co, cd):
    """Deterministic synthetic Conv2d/BatchNorm2d parameters (eval mode)."""
    cm = (co + cd) // 2
    dims = [co, cm, 2 * cd, cd, 2 * cd, cm, co]
    raw = []
    for li in range(6):
        cin, cout = dims[li], dims[li + 1]
        key, kw, kb, kg, kbe, km, kv = jax.random.split(key, 7)
        raw.append(dict(
            w=jax.random.normal(kw, (cout, cin), jnp.float32) * 0.1,     # conv weight
            b=jax.random.normal(kb, (cout,), jnp.float32) * 0.1,         # conv bias
            gamma=1.0 + 0.1 * jax.random.normal(kg, (cout,), jnp.float32),
            beta=0.1 * jax.random.normal(kbe, (cout,), jnp.float32),
            mean=0.1 * jax.random.normal(km, (cout,), jnp.float32),
            var=jnp.abs(1.0 + 0.1 * jax.random.normal(kv, (cout,), jnp.float32)),
        ))
    return raw


def fold_params(raw, eps=1e-5):
    """Fold eval-mode BN (+ conv bias) into per-layer (W', shift), zero-padded to
    a common (Cp, Cp) so all layers stack into two arrays for the kernel."""
    n_layers = len(raw)
    cmax = max(max(p["w"].shape) for p in raw)
    cpad = max(8, -(-cmax // 8) * 8)                # >=8, multiple of 8 sublanes
    w_all = jnp.zeros((n_layers, cpad, cpad), jnp.float32)
    s_all = jnp.zeros((n_layers, cpad, 1), jnp.float32)
    for li, p in enumerate(raw):
        cout, cin = p["w"].shape
        scale = p["gamma"] / jnp.sqrt(p["var"] + eps)
        w_fold = p["w"] * scale[:, None]                        # scale into W
        shift = (p["b"] - p["mean"]) * scale + p["beta"]        # remaining shift
        w_all = w_all.at[li, :cout, :cin].set(w_fold)
        s_all = s_all.at[li, :cout, 0].set(shift)
    return w_all, s_all


def autoencoder_forward(x_nchw, w_all, s_all, *, compute_dtype=jnp.bfloat16,
                        target_block_bytes=2 << 20, max_tile_hw=32768):
    """x_nchw: (N, co, H, W) float32 -> (N, co, H, W)."""
    n, co, hh, ww = x_nchw.shape
    hw = hh * ww
    n_layers, cpad, _ = w_all.shape

    x3 = x_nchw.reshape(n, co, hw)          # pure reshape: no transpose, no copy
    if co < cpad:
        # One-time HBM-side channel pad (replaces the per-step in-kernel concat).
        x3 = jnp.pad(x3, ((0, 0), (0, cpad - co), (0, 0)))

    nb, tile_hw = _choose_tiles(n, hw, cpad, x3.dtype.itemsize,
                                target_bytes=target_block_bytes,
                                max_tile_hw=max_tile_hw)
    grid = (n // nb, pl.cdiv(hw, tile_hw))

    kernel = functools.partial(_autoencoder_kernel, co=co, nb=nb,
                               n_layers=n_layers, compute_dtype=compute_dtype)

    out3 = pl.pallas_call(
        kernel,
        out_shape=jax.ShapeDtypeStruct((n, co, hw), x_nchw.dtype),
        grid_spec=pltpu.PrefetchScalarGridSpec(
            num_scalar_prefetch=0,
            grid=grid,
            in_specs=[
                pl.BlockSpec((nb, cpad, tile_hw), lambda b, t: (b, 0, t)),       # x
                pl.BlockSpec((n_layers, cpad, cpad), lambda b, t: (0, 0, 0)),    # W'
                pl.BlockSpec((n_layers, cpad, 1), lambda b, t: (0, 0, 0)),       # shift
            ],
            out_specs=pl.BlockSpec((nb, co, tile_hw), lambda b, t: (b, 0, t)),
        ),
        compiler_params=pltpu.CompilerParams(
            dimension_semantics=("parallel", "parallel"),
            vmem_limit_bytes=32 << 20),
    )(x3, w_all.astype(compute_dtype), s_all)

    return out3.reshape(n, co, hh, ww)


def _reference_forward(x_nchw, raw, eps=1e-5):
    """Pure-JAX reference of the unfolded conv -> BN(eval) -> ReLU chain."""
    h = x_nchw
    n_layers = len(raw)
    for li, p in enumerate(raw):
        y = jnp.einsum("oi,nihw->nohw", p["w"], h) + p["b"][None, :, None, None]
        y = (y - p["mean"][None, :, None, None]) \
            / jnp.sqrt(p["var"] + eps)[None, :, None, None] \
            * p["gamma"][None, :, None, None] + p["beta"][None, :, None, None]
        if li < n_layers - 1:
            y = jnp.maximum(y, 0.0)
        h = y
    return h


if __name__ == "__main__":
    co, cd = 8, 4            # channel chain: 8 -> 6 -> 8 -> 4 -> 8 -> 6 -> 8
    n, hh, ww = 2, 16, 16    # N*H*W = 512 pixels

    key = jax.random.PRNGKey(0)
    kx, kp = jax.random.split(key)
    x = jax.random.normal(kx, (n, co, hh, ww), jnp.float32)

    raw = make_raw_params(kp, co, cd)
    w_all, s_all = fold_params(raw)
    ref = _reference_forward(x, raw)

    # Exact path (f32 MXU operands): tight tolerance proves the BN/bias fold.
    out_f32 = jax.block_until_ready(
        autoencoder_forward(x, w_all, s_all, compute_dtype=jnp.float32))
    assert out_f32.shape == (n, co, hh, ww)
    assert jnp.allclose(out_f32, ref, atol=1e-3, rtol=1e-3), \
        float(jnp.max(jnp.abs(out_f32 - ref)))

    # Fast path (default): bf16 MXU operands, f32 accumulation.
    out_bf16 = jax.block_until_ready(autoencoder_forward(x, w_all, s_all))
    assert out_bf16.shape == (n, co, hh, ww)
    assert jnp.allclose(out_bf16, ref, atol=2e-2, rtol=2e-2), \
        float(jnp.max(jnp.abs(out_bf16 - ref)))

    print("KERNEL_OK")
</pallas_src>

<mosaic_0001>
module attributes {stable_mosaic.version = 11 : i64} {
  func.func @_autoencoder_kernel(%arg0: i32, %arg1: i32, %arg2: memref<1x8x256xf32, #tpu.memory_space<vmem>>, %arg3: memref<6x8x8xf32, #tpu.memory_space<vmem>>, %arg4: memref<6x8x1xf32, #tpu.memory_space<vmem>>, %arg5: memref<1x8x256xf32, #tpu.memory_space<vmem>>) attributes {dimension_semantics = [#tpu.dimension_semantics<parallel>, #tpu.dimension_semantics<parallel>], iteration_bounds = array<i64: 2, 1>, scalar_prefetch = 0 : i64, scratch_operands = 0 : i64, tpu.core_type = #tpu.core_type<tc>, window_params = [{transform_indices = @transform_0, window_bounds = array<i64: 1, 8, 256>}, {pipeline_mode = #tpu.pipeline_mode<synchronous>, transform_indices = @transform_1, window_bounds = array<i64: 6, 8, 8>}, {pipeline_mode = #tpu.pipeline_mode<synchronous>, transform_indices = @transform_2, window_bounds = array<i64: 6, 8, 1>}, {transform_indices = @transform_3, window_bounds = array<i64: 1, 8, 256>}]} {
    %c0 = arith.constant 0 : index
    %c0_0 = arith.constant 0 : index
    %c0_1 = arith.constant 0 : index
    %0 = vector.load %arg2[%c0, %c0_0, %c0_1] : memref<1x8x256xf32, #tpu.memory_space<vmem>>, vector<1x8x256xf32>
    %1 = vector.shape_cast %0 : vector<1x8x256xf32> to vector<8x256xf32>
    %c0_2 = arith.constant 0 : index
    %c0_3 = arith.constant 0 : index
    %c0_4 = arith.constant 0 : index
    %2 = vector.load %arg3[%c0_2, %c0_3, %c0_4] : memref<6x8x8xf32, #tpu.memory_space<vmem>>, vector<1x8x8xf32>
    %3 = vector.shape_cast %2 : vector<1x8x8xf32> to vector<8x8xf32>
    %cst = arith.constant dense<0.000000e+00> : vector<8x256xf32>
    %4 = tpu.matmul %3, %1, %cst {dimension_numbers = #tpu.dot_dimension_numbers<[1], [0], [0], [1], [0, 0, 1, 1], [], []>} : vector<8x8xf32>, vector<8x256xf32>, vector<8x256xf32> -> vector<8x256xf32>
    %c0_5 = arith.constant 0 : index
    %c0_6 = arith.constant 0 : index
    %c0_7 = arith.constant 0 : index
    %5 = vector.load %arg4[%c0_5, %c0_6, %c0_7] : memref<6x8x1xf32, #tpu.memory_space<vmem>>, vector<1x8x1xf32>
    %6 = vector.shape_cast %5 : vector<1x8x1xf32> to vector<8x1xf32>
    %7 = vector.broadcast %6 : vector<8x1xf32> to vector<8x256xf32>
    %8 = arith.addf %4, %7 : vector<8x256xf32>
    %cst_8 = arith.constant 0.000000e+00 : f32
    %9 = vector.broadcast %cst_8 : f32 to vector<8x256xf32>
    %10 = arith.maximumf %8, %9 : vector<8x256xf32>
    %c1 = arith.constant 1 : index
    %c0_9 = arith.constant 0 : index
    %c0_10 = arith.constant 0 : index
    %11 = vector.load %arg3[%c1, %c0_9, %c0_10] : memref<6x8x8xf32, #tpu.memory_space<vmem>>, vector<1x8x8xf32>
    %12 = vector.shape_cast %11 : vector<1x8x8xf32> to vector<8x8xf32>
    %cst_11 = arith.constant dense<0.000000e+00> : vector<8x256xf32>
    %13 = tpu.matmul %12, %10, %cst_11 {dimension_numbers = #tpu.dot_dimension_numbers<[1], [0], [0], [1], [0, 0, 1, 1], [], []>} : vector<8x8xf32>, vector<8x256xf32>, vector<8x256xf32> -> vector<8x256xf32>
    %c1_12 = arith.constant 1 : index
    %c0_13 = arith.constant 0 : index
    %c0_14 = arith.constant 0 : index
    %14 = vector.load %arg4[%c1_12, %c0_13, %c0_14] : memref<6x8x1xf32, #tpu.memory_space<vmem>>, vector<1x8x1xf32>
    %15 = vector.shape_cast %14 : vector<1x8x1xf32> to vector<8x1xf32>
    %16 = vector.broadcast %15 : vector<8x1xf32> to vector<8x256xf32>
    %17 = arith.addf %13, %16 : vector<8x256xf32>
    %cst_15 = arith.constant 0.000000e+00 : f32
    %18 = vector.broadcast %cst_15 : f32 to vector<8x256xf32>
    %19 = arith.maximumf %17, %18 : vector<8x256xf32>
    %c2 = arith.constant 2 : index
    %c0_16 = arith.constant 0 : index
    %c0_17 = arith.constant 0 : index
    %20 = vector.load %arg3[%c2, %c0_16, %c0_17] : memref<6x8x8xf32, #tpu.memory_space<vmem>>, vector<1x8x8xf32>
    %21 = vector.shape_cast %20 : vector<1x8x8xf32> to vector<8x8xf32>
    %cst_18 = arith.constant dense<0.000000e+00> : vector<8x256xf32>
    %22 = tpu.matmul %21, %19, %cst_18 {dimension_numbers = #tpu.dot_dimension_numbers<[1], [0], [0], [1], [0, 0, 1, 1], [], []>} : vector<8x8xf32>, vector<8x256xf32>, vector<8x256xf32> -> vector<8x256xf32>
    %c2_19 = arith.constant 2 : index
    %c0_20 = arith.constant 0 : index
    %c0_21 = arith.constant 0 : index
    %23 = vector.load %arg4[%c2_19, %c0_20, %c0_21] : memref<6x8x1xf32, #tpu.memory_space<vmem>>, vector<1x8x1xf32>
    %24 = vector.shape_cast %23 : vector<1x8x1xf32> to vector<8x1xf32>
    %25 = vector.broadcast %24 : vector<8x1xf32> to vector<8x256xf32>
    %26 = arith.addf %22, %25 : vector<8x256xf32>
    %cst_22 = arith.constant 0.000000e+00 : f32
    %27 = vector.broadcast %cst_22 : f32 to vector<8x256xf32>
    %28 = arith.maximumf %26, %27 : vector<8x256xf32>
    %c3 = arith.constant 3 : index
    %c0_23 = arith.constant 0 : index
    %c0_24 = arith.constant 0 : index
    %29 = vector.load %arg3[%c3, %c0_23, %c0_24] : memref<6x8x8xf32, #tpu.memory_space<vmem>>, vector<1x8x8xf32>
    %30 = vector.shape_cast %29 : vector<1x8x8xf32> to vector<8x8xf32>
    %cst_25 = arith.constant dense<0.000000e+00> : vector<8x256xf32>
    %31 = tpu.matmul %30, %28, %cst_25 {dimension_numbers = #tpu.dot_dimension_numbers<[1], [0], [0], [1], [0, 0, 1, 1], [], []>} : vector<8x8xf32>, vector<8x256xf32>, vector<8x256xf32> -> vector<8x256xf32>
    %c3_26 = arith.constant 3 : index
    %c0_27 = arith.constant 0 : index
    %c0_28 = arith.constant 0 : index
    %32 = vector.load %arg4[%c3_26, %c0_27, %c0_28] : memref<6x8x1xf32, #tpu.memory_space<vmem>>, vector<1x8x1xf32>
    %33 = vector.shape_cast %32 : vector<1x8x1xf32> to vector<8x1xf32>
    %34 = vector.broadcast %33 : vector<8x1xf32> to vector<8x256xf32>
    %35 = arith.addf %31, %34 : vector<8x256xf32>
    %cst_29 = arith.constant 0.000000e+00 : f32
    %36 = vector.broadcast %cst_29 : f32 to vector<8x256xf32>
    %37 = arith.maximumf %35, %36 : vector<8x256xf32>
    %c4 = arith.constant 4 : index
    %c0_30 = arith.constant 0 : index
    %c0_31 = arith.constant 0 : index
    %38 = vector.load %arg3[%c4, %c0_30, %c0_31] : memref<6x8x8xf32, #tpu.memory_space<vmem>>, vector<1x8x8xf32>
    %39 = vector.shape_cast %38 : vector<1x8x8xf32> to vector<8x8xf32>
    %cst_32 = arith.constant dense<0.000000e+00> : vector<8x256xf32>
    %40 = tpu.matmul %39, %37, %cst_32 {dimension_numbers = #tpu.dot_dimension_numbers<[1], [0], [0], [1], [0, 0, 1, 1], [], []>} : vector<8x8xf32>, vector<8x256xf32>, vector<8x256xf32> -> vector<8x256xf32>
    %c4_33 = arith.constant 4 : index
    %c0_34 = arith.constant 0 : index
    %c0_35 = arith.constant 0 : index
    %41 = vector.load %arg4[%c4_33, %c0_34, %c0_35] : memref<6x8x1xf32, #tpu.memory_space<vmem>>, vector<1x8x1xf32>
    %42 = vector.shape_cast %41 : vector<1x8x1xf32> to vector<8x1xf32>
    %43 = vector.broadcast %42 : vector<8x1xf32> to vector<8x256xf32>
    %44 = arith.addf %40, %43 : vector<8x256xf32>
    %cst_36 = arith.constant 0.000000e+00 : f32
    %45 = vector.broadcast %cst_36 : f32 to vector<8x256xf32>
    %46 = arith.maximumf %44, %45 : vector<8x256xf32>
    %c5 = arith.constant 5 : index
    %c0_37 = arith.constant 0 : index
    %c0_38 = arith.constant 0 : index
    %47 = vector.load %arg3[%c5, %c0_37, %c0_38] : memref<6x8x8xf32, #tpu.memory_space<vmem>>, vector<1x8x8xf32>
    %48 = vector.shape_cast %47 : vector<1x8x8xf32> to vector<8x8xf32>
    %cst_39 = arith.constant dense<0.000000e+00> : vector<8x256xf32>
    %49 = tpu.matmul %48, %46, %cst_39 {dimension_numbers = #tpu.dot_dimension_numbers<[1], [0], [0], [1], [0, 0, 1, 1], [], []>} : vector<8x8xf32>, vector<8x256xf32>, vector<8x256xf32> -> vector<8x256xf32>
    %c5_40 = arith.constant 5 : index
    %c0_41 = arith.constant 0 : index
    %c0_42 = arith.constant 0 : index
    %50 = vector.load %arg4[%c5_40, %c0_41, %c0_42] : memref<6x8x1xf32, #tpu.memory_space<vmem>>, vector<1x8x1xf32>
    %51 = vector.shape_cast %50 : vector<1x8x1xf32> to vector<8x1xf32>
    %52 = vector.broadcast %51 : vector<8x1xf32> to vector<8x256xf32>
    %53 = arith.addf %49, %52 : vector<8x256xf32>
    %c0_43 = arith.constant 0 : index
    %c0_44 = arith.constant 0 : index
    %c0_45 = arith.constant 0 : index
    %54 = vector.load %arg5[%c0_43, %c0_44, %c0_45] : memref<1x8x256xf32, #tpu.memory_space<vmem>>, vector<1x8x256xf32>
    %55 = vector.shape_cast %54 : vector<1x8x256xf32> to vector<8x256xf32>
    %56 = vector.shape_cast %53 : vector<8x256xf32> to vector<1x8x256xf32>
    tpu.vector_store %arg5[%c0_43, %c0_44, %c0_45], %56 {strides = array<i32>} : memref<1x8x256xf32, #tpu.memory_space<vmem>>, vector<1x8x256xf32>,
    return
  }
  func.func @transform_0(%arg0: i32, %arg1: i32) -> (i32, i32, i32) {
    %c0_i32 = arith.constant 0 : i32
    %c0_i32_0 = arith.constant 0 : i32
    return %arg0, %c0_i32, %arg1 : i32, i32, i32
  }
  func.func @transform_1(%arg0: i32, %arg1: i32) -> (i32, i32, i32) {
    %c0_i32 = arith.constant 0 : i32
    %c0_i32_0 = arith.constant 0 : i32
    %c0_i32_1 = arith.constant 0 : i32
    %c0_i32_2 = arith.constant 0 : i32
    return %c0_i32, %c0_i32_0, %c0_i32_1 : i32, i32, i32
  }
  func.func @transform_2(%arg0: i32, %arg1: i32) -> (i32, i32, i32) {
    %c0_i32 = arith.constant 0 : i32
    %c0_i32_0 = arith.constant 0 : i32
    %c0_i32_1 = arith.constant 0 : i32
    %c0_i32_2 = arith.constant 0 : i32
    return %c0_i32, %c0_i32_0, %c0_i32_1 : i32, i32, i32
  }
  func.func @transform_3(%arg0: i32, %arg1: i32) -> (i32, i32, i32) {
    %c0_i32 = arith.constant 0 : i32
    %c0_i32_0 = arith.constant 0 : i32
    return %arg0, %c0_i32, %arg1 : i32, i32, i32
  }
}

</mosaic_0001>

<llo_original>
// kernel: tpu_custom_call.1
$region0: #{tpu_custom_call.1}
  #allocation0 [shape = 'u32[]', space=smem, size = 0x4, offset = 0x4, fixed_abs, tag = 'smem constant byte address 0x4 - core index']
  #allocation1 [shape = 'u32[144,128]{1,0:T(1,128)}', space=vmem, size = 0x12000, scoped, tag = 'internal scratch']
  %s0 = inlined_call_operand.hbm [shape: f32[2,8,256], index: 0, kind: input, shape index: {}]
  %s1 = inlined_call_operand.vmem [shape: f32[6,8,8], index: 1, kind: input, shape index: {}]
  %s2 = inlined_call_operand.vmem [shape: f32[6,8,1], index: 2, kind: input, shape index: {}]
  %s3 = inlined_call_operand.hbm [shape: f32[2,8,256], index: 3, kind: output, shape index: {}]
  %s4 = sld [smem:[#allocation0]]
  $region49: #{tpu_custom_call.1} parent=0
    _
  %s6 = ssub.s32 1, %s4
  %s7 = scalar_select 0, %s6, %s4
  $region1: #{tpu_custom_call.1} parent=0
    #allocation2 [shape = 'u8[16384]{0}', space=vmem, size = 0x4000, scoped, tag = 'input window, operand 0']
    #allocation3 [shape = 's32[2]{0}', space=sflag, size = 0x8, scoped, tag = 'scoped memory for tpu_custom_call.1']
    #allocation4 [shape = 's32[2]{0}', space=sflag, size = 0x8, scoped, tag = 'scoped memory for tpu_custom_call.1']
    #allocation5 [shape = 'u8[16384]{0}', space=vmem, size = 0x4000, scoped, tag = 'output window, operand 0']
    %8 = vsyncpa [#allocation3], 0
    %s9 = scalar_lea.sflag [#allocation3], 1
    %10 = vsyncpa %s9, 0
    %11 = vsyncpa [#allocation4], 0
    %s12 = scalar_lea.sflag [#allocation4], 1
    %13 = vsyncpa %s12, 0
    loop: start=0, step=1, limit=4
    $region2: #{tpu_custom_call.1} parent=1 // loop_pre_header
      _
    $region3: #{tpu_custom_call.1} parent=1 // loop_header
      %s15 = sphi 0, %s19
      %p16 = scmp.ge.s32.totalorder %s15, 4
      %s22 = sphi 0, %s34
      %s23 = sphi 0, %s30
      %s24 = sphi 0, %s22
      %s25 = sphi 0, %s23
      %s26 = sphi 0, %s24
      %s27 = sphi 0, %s25
      %s39 = sphi 0, %s41
      %s42 = sphi 0, %s39
      %s43 = sphi 0, %s42
      %s59 = sphi 0, %s43
      %s63 = sphi 0, %s63
      %s65 = sphi 0, %s63
      %s66 = sphi 0, %s65
      %s80 = sphi 0, %s66
      %s84 = sphi 0, %s84
      %s86 = sphi 0, %s84
      %s87 = sphi 0, %s86
      %s101 = sphi 0, %s87
      %s109 = sphi 0, %s111
      %s112 = sphi 0, %s109
      %s113 = sphi 0, %s112
      %s129 = sphi 0, %s113
    $region4: #{tpu_custom_call.1} parent=1 // loop_header_branch
      %18 = sbr.rel (%p16) target = $region8
    $region5: #{tpu_custom_call.1} parent=1 // loop_body
      %s20 = ssub.s32 %s15, 1
      %s21 = ssub.s32 %s15, 2
      %s28 = sadd.s32 1, %s23
      %p29 = scmp.ge.s32.totalorder %s28, 1
      %s30 = scalar_select %p29, 0, %s28
      %s31 = sadd.s32 1, %s22
      %s32 = scalar_select %p29, %s31, %s22
      %p33 = scmp.ge.s32.totalorder %s32, 2
      %s34 = scalar_select %p33, 0, %s32
      %s35 = ssub.s32 %s22, %s34
      %s36 = ssub.s32 %s23, %s30
      %s37 = sor.u32 %s35, %s36
      %p38 = scmp.eq.s32.totalorder %s37, 0
      %s40 = sadd.s32 %s39, 1
      %s41 = scalar_select %p38, %s39, %s40
      %p44 = pneg %p38
      %p45 = scmp.eq.s32.totalorder %s15, 1
      %p46 = por %p44, %p45
      %p47 = scmp.ne.s32.totalorder %s39, %s42
      %p48 = scmp.eq.s32.totalorder %s15, 0
      %p49 = por %p47, %p48
      %p50 = scmp.ne.s32.totalorder %s39, %s42
      %p51 = scmp.eq.s32.totalorder %s20, 1
      %p52 = por %p50, %p51
      %p53 = scmp.ne.s32.totalorder %s42, %s43
      %p54 = scmp.eq.s32.totalorder %s20, 0
      %p55 = por %p53, %p54
      %p56 = scmp.ne.s32.totalorder %s42, %s43
      %p57 = scmp.eq.s32.totalorder %s21, 1
      %p58 = por %p56, %p57
      %p60 = scmp.ne.s32.totalorder %s43, %s59
      %p61 = scmp.eq.s32.totalorder %s21, 0
      %p62 = por %p60, %p61
      %s64 = sadd.s32 %s63, 1
      %p67 = scmp.eq.s32.totalorder %s15, 1
      %p68 = scmp.ne.s32.totalorder %s63, %s65
      %p69 = scmp.eq.s32.totalorder %s15, 0
      %p70 = por %p68, %p69
      %p71 = scmp.ne.s32.totalorder %s63, %s65
      %p72 = scmp.eq.s32.totalorder %s20, 1
      %p73 = por %p71, %p72
      %p74 = scmp.ne.s32.totalorder %s65, %s66
      %p75 = scmp.eq.s32.totalorder %s20, 0
      %p76 = por %p74, %p75
      %p77 = scmp.ne.s32.totalorder %s65, %s66
      %p78 = scmp.eq.s32.totalorder %s21, 1
      %p79 = por %p77, %p78
      %p81 = scmp.ne.s32.totalorder %s66, %s80
      %p82 = scmp.eq.s32.totalorder %s21, 0
      %p83 = por %p81, %p82
      %s85 = sadd.s32 %s84, 1
      %p88 = scmp.eq.s32.totalorder %s15, 1
      %p89 = scmp.ne.s32.totalorder %s84, %s86
      %p90 = scmp.eq.s32.totalorder %s15, 0
      %p91 = por %p89, %p90
      %p92 = scmp.ne.s32.totalorder %s84, %s86
      %p93 = scmp.eq.s32.totalorder %s20, 1
      %p94 = por %p92, %p93
      %p95 = scmp.ne.s32.totalorder %s86, %s87
      %p96 = scmp.eq.s32.totalorder %s20, 0
      %p97 = por %p95, %p96
      %p98 = scmp.ne.s32.totalorder %s86, %s87
      %p99 = scmp.eq.s32.totalorder %s21, 1
      %p100 = por %p98, %p99
      %p102 = scmp.ne.s32.totalorder %s87, %s101
      %p103 = scmp.eq.s32.totalorder %s21, 0
      %p104 = por %p102, %p103
      %s105 = ssub.s32 %s22, %s34
      %s106 = ssub.s32 %s23, %s30
      %s107 = sor.u32 %s105, %s106
      %p108 = scmp.eq.s32.totalorder %s107, 0
      %s110 = sadd.s32 %s109, 1
      %s111 = scalar_select %p108, %s109, %s110
      %p114 = pneg %p108
      %p115 = scmp.eq.s32.totalorder %s15, 1
      %p116 = por %p114, %p115
      %p117 = scmp.ne.s32.totalorder %s109, %s112
      %p118 = scmp.eq.s32.totalorder %s15, 0
      %p119 = por %p117, %p118
      %p120 = scmp.ne.s32.totalorder %s109, %s112
      %p121 = scmp.eq.s32.totalorder %s20, 1
      %p122 = por %p120, %p121
      %p123 = scmp.ne.s32.totalorder %s112, %s113
      %p124 = scmp.eq.s32.totalorder %s20, 0
      %p125 = por %p123, %p124
      %p126 = scmp.ne.s32.totalorder %s112, %s113
      %p127 = scmp.eq.s32.totalorder %s21, 1
      %p128 = por %p126, %p127
      %p130 = scmp.ne.s32.totalorder %s113, %s129
      %p131 = scmp.eq.s32.totalorder %s21, 0
      %p132 = por %p130, %p131
      %p133 = scmp.le.s32.totalorder 1, %s15
      %p134 = scmp.lt.s32.totalorder %s15, 3
      %p135 = pnand %p133, %p134
      %p136 = pneg %p135
      // Predicated region
      $region9: #{tpu_custom_call.1} parent=5 // pred_check
        _
      $region10: #{tpu_custom_call.1} parent=5 // pred_check_branch
        %138 = sbr.rel (%p135) target = $region12
      $region11: #{tpu_custom_call.1} parent=5 // pred_region
        %s139 = ssub.s32 %s15, 1
        // Predicated region
        $region13: #{tpu_custom_call.1} parent=11 // pred_check
          %p140 = pneg %p76
        $region14: #{tpu_custom_call.1} parent=11 // pred_check_branch
          %142 = sbr.rel (%p140) target = $region16
        $region15: #{tpu_custom_call.1} parent=11 // pred_region
          _
        $region16: #{tpu_custom_call.1} parent=11 // pred_fallthru
          _
        // Predicated region
        $region17: #{tpu_custom_call.1} parent=11 // pred_check
          %p143 = pneg %p97
        $region18: #{tpu_custom_call.1} parent=11 // pred_check_branch
          %145 = sbr.rel (%p143) target = $region20
        $region19: #{tpu_custom_call.1} parent=11 // pred_region
          _
        $region20: #{tpu_custom_call.1} parent=11 // pred_fallthru
          _
      $region12: #{tpu_custom_call.1} parent=5 // pred_fallthru
        _
      %p146 = scmp.lt.s32.totalorder %s15, 2
      // Predicated region
      $region21: #{tpu_custom_call.1} parent=5 // pred_check
        %p147 = pneg %p146
      $region22: #{tpu_custom_call.1} parent=5 // pred_check_branch
        %149 = sbr.rel (%p147) target = $region24
      $region23: #{tpu_custom_call.1} parent=5 // pred_region
        // Predicated region
        $region25: #{tpu_custom_call.1} parent=23 // pred_check
          %p150 = pneg %p49
        $region26: #{tpu_custom_call.1} parent=23 // pred_check_branch
          %152 = sbr.rel (%p150) target = $region28
        $region27: #{tpu_custom_call.1} parent=23 // pred_region
          %s153 = sand.u32 %s39, 1
          %s154 = scalar_lea.sflag [#allocation3], %s153
          %s155 = sand.u32 %s39, 1
          %s156 = smul.addr %s155, 16
          %s157 = scalar_lea.vmem [#allocation2], %s156
          %s158 = smul.u32 2, %s23
          %s160 = ssub.s32 256, 256
          %161 = vsyncadd %s154, %s160
          %s162 = smul.addr %s22, 2
          %s163 = sadd.s32 %s158, %s162
          %s164 = smul.addr %s163, 128
          %s165 = scalar_lea.hbm %s0, %s164
          %s167 = sshll.u32 %s157, 4
          %s168 = int_to_ptr.vmem [resolvable:$true] %s167
          %170 = dma.hbm_to_vmem [thread:$0]  %s165, 256, %s168, %s154
        $region28: #{tpu_custom_call.1} parent=23 // pred_fallthru
          _
      $region24: #{tpu_custom_call.1} parent=5 // pred_fallthru
        _
      %p171 = scmp.le.s32.totalorder 1, %s15
      %p172 = scmp.lt.s32.totalorder %s15, 3
      %p173 = pnand %p171, %p172
      %p174 = pneg %p173
      // Predicated region
      $region29: #{tpu_custom_call.1} parent=5 // pred_check
        _
      $region30: #{tpu_custom_call.1} parent=5 // pred_check_branch
        %176 = sbr.rel (%p173) target = $region32
      $region31: #{tpu_custom_call.1} parent=5 // pred_region
        %s177 = ssub.s32 %s15, 1
        %s178 = sand.u32 %s42, 1
        %s179 = scalar_lea.sflag [#allocation3], %s178
        %s180 = sand.u32 %s42, 1
        %s181 = smul.addr %s180, 16
        %s182 = scalar_lea.vmem [#allocation2], %s181
        // Predicated region
        $region33: #{tpu_custom_call.1} parent=31 // pred_check
          %p183 = pneg %p55
        $region34: #{tpu_custom_call.1} parent=31 // pred_check_branch
          %185 = sbr.rel (%p183) target = $region36
        $region35: #{tpu_custom_call.1} parent=31 // pred_region
          %186 = dma.done %s179, 256
        $region36: #{tpu_custom_call.1} parent=31 // pred_fallthru
          _
        %s187 = sand.u32 %s42, 1
        %s188 = scalar_lea.sflag [#allocation3], %s187
        %s189 = sand.u32 %s42, 1
        %s190 = smul.addr %s189, 16
        %s191 = scalar_lea.vmem [#allocation2], %s190
        %p192 = pneg %p55
        %p193 = pneg %p52
        %p194 = pneg %p76
        %p195 = pneg %p73
        %p196 = pneg %p97
        %p197 = pneg %p94
        %p198 = pneg %p125
        %p199 = pneg %p122
        %s200 = sand.u32 %s112, 1
        %s201 = scalar_lea.sflag [#allocation4], %s200
        %s202 = sand.u32 %s112, 1
        %s203 = smul.addr %s202, 16
        %s204 = scalar_lea.vmem [#allocation5], %s203
        %s205 = smul.u32 2, %s25
        %s206 = smul.u32 2, %s25
        %v207 = vld [vmem:[%s182] sm:$0xff]
        %v208 = vld [vmem:[%s182 + $0x8] sm:$0xff]
        %v209 = vld [vmem:[%s1] sm:$0xff]
        %v210 = vld [vmem:[%s2] sm:$0xff]
        %212 = vset.pattern.permute.xlu0 0
        %213 = vperm.xlu0 %212, %v210
        %v214 = vpop.permute.xlu0 %213
        %vm216 = vcmask 64512
        %v218 = vsel %vm216, %v209, 0
        %220 = vmatprep.subr.mxu0 %v208
        %221 = vmatpush1.msra.mxu0 %v207
        %222 = vmatprep.subr.mxu0 0.0
        %223 = vmatpush1.msra.mxu0 0.0
        %224 = vmatprep.subr.mxu0 0.0
        %225 = vmatpush1.msra.mxu0 0.0
        %226 = vmatprep.subr.mxu0 0.0
        %227 = vmatpush1.msra.mxu0 0.0
        %228 = vmatprep.subr.mxu0 0.0
        %229 = vmatpush1.msra.mxu0 0.0
        %230 = vmatprep.subr.mxu0 0.0
        %231 = vmatpush1.msra.mxu0 0.0
        %232 = vmatprep.subr.mxu0 0.0
        %233 = vmatpush1.msra.mxu0 0.0
        %234 = vmatprep.subr.mxu0 0.0
        %235 = vmatpush1.msra.mxu0 0.0
        %236 = vmatprep.subr.mxu0 0.0
        %237 = vmatpush1.msra.mxu0 0.0
        %238 = vmatprep.subr.mxu0 0.0
        %239 = vmatpush1.msra.mxu0 0.0
        %240 = vmatprep.subr.mxu0 0.0
        %241 = vmatpush1.msra.mxu0 0.0
        %242 = vmatprep.subr.mxu0 0.0
        %243 = vmatpush1.msra.mxu0 0.0
        %244 = vmatprep.subr.mxu0 0.0
        %245 = vmatpush1.msra.mxu0 0.0
        %246 = vmatprep.subr.mxu0 0.0
        %247 = vmatpush1.msra.mxu0 0.0
        %248 = vmatprep.subr.mxu0 0.0
        %249 = vmatpush1.msra.mxu0 0.0
        %250 = vmatprep.subr.mxu0 0.0
        %251 = vmatpush1.msra.mxu0 0.0
        %252 = vmatprep.subr.mxu0 0.0
        %253 = vmatpush1.msra.mxu0 0.0
        %254 = vmatprep.subr.mxu0 0.0
        %255 = vmatpush1.msra.mxu0 0.0
        %256 = vmatprep.subr.mxu0 0.0
        %257 = vmatpush1.msra.mxu0 0.0
        %258 = vmatprep.subr.mxu0 0.0
        %259 = vmatpush1.msra.mxu0 0.0
        %260 = vmatprep.subr.mxu0 0.0
        %261 = vmatpush1.msra.mxu0 0.0
        %262 = vmatprep.subr.mxu0 0.0
        %263 = vmatpush1.msra.mxu0 0.0
        %264 = vmatprep.subr.mxu0 0.0
        %265 = vmatpush1.msra.mxu0 0.0
        %266 = vmatprep.subr.mxu0 0.0
        %267 = vmatpush1.msra.mxu0 0.0
        %268 = vmatprep.subr.mxu0 0.0
        %269 = vmatpush1.msra.mxu0 0.0
        %270 = vmatprep.subr.mxu0 0.0
        %271 = vmatpush1.msra.mxu0 0.0
        %272 = vmatprep.subr.mxu0 0.0
        %273 = vmatpush1.msra.mxu0 0.0
        %274 = vmatprep.subr.mxu0 0.0
        %275 = vmatpush1.msra.mxu0 0.0
        %276 = vmatprep.subr.mxu0 0.0
        %277 = vmatpush1.msra.mxu0 0.0
        %278 = vmatprep.subr.mxu0 0.0
        %279 = vmatpush1.msra.mxu0 0.0
        %280 = vmatprep.subr.mxu0 0.0
        %281 = vmatpush1.msra.mxu0 0.0
        %282 = vmatprep.subr.mxu0 0.0
        %283 = vmatpush1.msra.mxu0 0.0
        %284 = vmatprep.mubr.f32.mxu0 0.0
        %285 = vmatmul.mubr.f32.gmra.mrb[0].mxu0 %v218
        %v286 = vpop.f32.mrb[0].mxu0
        %v287 = vadd.f32 %v214, %v286
        %v288 = vpop.f32.mrb[0].mxu0
        %v289 = vadd.f32 %v214, %v288
        %290 = vdwg.mxu0
        %v291 = vmax.f32 %v287, 0.0
        %v292 = vmax.f32 %v289, 0.0
        %s293 = scalar_lea.vmem %s1, 8
        %v294 = vld [vmem:[%s293] sm:$0xff]
        %s295 = scalar_lea.vmem %s2, 8
        %v296 = vld [vmem:[%s295] sm:$0xff]
        %298 = vset.pattern.permute.xlu0 0
        %299 = vperm.xlu0 %298, %v296
        %v300 = vpop.permute.xlu0 %299
        %v303 = vsel %vm216, %v294, 0
        %305 = vmatprep.subr.mxu0 %v292
        %306 = vmatpush1.msra.mxu0 %v291
        %307 = vmatprep.subr.mxu0 0.0
        %308 = vmatpush1.msra.mxu0 0.0
        %309 = vmatprep.subr.mxu0 0.0
        %310 = vmatpush1.msra.mxu0 0.0
        %311 = vmatprep.subr.mxu0 0.0
        %312 = vmatpush1.msra.mxu0 0.0
        %313 = vmatprep.subr.mxu0 0.0
        %314 = vmatpush1.msra.mxu0 0.0
        %315 = vmatprep.subr.mxu0 0.0
        %316 = vmatpush1.msra.mxu0 0.0
        %317 = vmatprep.subr.mxu0 0.0
        %318 = vmatpush1.msra.mxu0 0.0
        %319 = vmatprep.subr.mxu0 0.0
        %320 = vmatpush1.msra.mxu0 0.0
        %321 = vmatprep.subr.mxu0 0.0
        %322 = vmatpush1.msra.mxu0 0.0
        %323 = vmatprep.subr.mxu0 0.0
        %324 = vmatpush1.msra.mxu0 0.0
        %325 = vmatprep.subr.mxu0 0.0
        %326 = vmatpush1.msra.mxu0 0.0
        %327 = vmatprep.subr.mxu0 0.0
        %328 = vmatpush1.msra.mxu0 0.0
        %329 = vmatprep.subr.mxu0 0.0
        %330 = vmatpush1.msra.mxu0 0.0
        %331 = vmatprep.subr.mxu0 0.0
        %332 = vmatpush1.msra.mxu0 0.0
        %333 = vmatprep.subr.mxu0 0.0
        %334 = vmatpush1.msra.mxu0 0.0
        %335 = vmatprep.subr.mxu0 0.0
        %336 = vmatpush1.msra.mxu0 0.0
        %337 = vmatprep.subr.mxu0 0.0
        %338 = vmatpush1.msra.mxu0 0.0
        %339 = vmatprep.subr.mxu0 0.0
        %340 = vmatpush1.msra.mxu0 0.0
        %341 = vmatprep.subr.mxu0 0.0
        %342 = vmatpush1.msra.mxu0 0.0
        %343 = vmatprep.subr.mxu0 0.0
        %344 = vmatpush1.msra.mxu0 0.0
        %345 = vmatprep.subr.mxu0 0.0
        %346 = vmatpush1.msra.mxu0 0.0
        %347 = vmatprep.subr.mxu0 0.0
        %348 = vmatpush1.msra.mxu0 0.0
        %349 = vmatprep.subr.mxu0 0.0
        %350 = vmatpush1.msra.mxu0 0.0
        %351 = vmatprep.subr.mxu0 0.0
        %352 = vmatpush1.msra.mxu0 0.0
        %353 = vmatprep.subr.mxu0 0.0
        %354 = vmatpush1.msra.mxu0 0.0
        %355 = vmatprep.subr.mxu0 0.0
        %356 = vmatpush1.msra.mxu0 0.0
        %357 = vmatprep.subr.mxu0 0.0
        %358 = vmatpush1.msra.mxu0 0.0
        %359 = vmatprep.subr.mxu0 0.0
        %360 = vmatpush1.msra.mxu0 0.0
        %361 = vmatprep.subr.mxu0 0.0
        %362 = vmatpush1.msra.mxu0 0.0
        %363 = vmatprep.subr.mxu0 0.0
        %364 = vmatpush1.msra.mxu0 0.0
        %365 = vmatprep.subr.mxu0 0.0
        %366 = vmatpush1.msra.mxu0 0.0
        %367 = vmatprep.subr.mxu0 0.0
        %368 = vmatpush1.msra.mxu0 0.0
        %369 = vmatprep.mubr.f32.mxu0 0.0
        %370 = vmatmul.mubr.f32.gmra.mrb[0].mxu0 %v303
        %v371 = vpop.f32.mrb[0].mxu0
        %v372 = vadd.f32 %v300, %v371
        %v373 = vpop.f32.mrb[0].mxu0
        %v374 = vadd.f32 %v300, %v373
        %375 = vdwg.mxu0
        %v376 = vmax.f32 %v372, 0.0
        %v377 = vmax.f32 %v374, 0.0
        %s378 = scalar_lea.vmem %s1, 16
        %v379 = vld [vmem:[%s378] sm:$0xff]
        %s380 = scalar_lea.vmem %s2, 16
        %v381 = vld [vmem:[%s380] sm:$0xff]
        %383 = vset.pattern.permute.xlu0 0
        %384 = vperm.xlu0 %383, %v381
        %v385 = vpop.permute.xlu0 %384
        %v388 = vsel %vm216, %v379, 0
        %390 = vmatprep.subr.mxu0 %v377
        %391 = vmatpush1.msra.mxu0 %v376
        %392 = vmatprep.subr.mxu0 0.0
        %393 = vmatpush1.msra.mxu0 0.0
        %394 = vmatprep.subr.mxu0 0.0
        %395 = vmatpush1.msra.mxu0 0.0
        %396 = vmatprep.subr.mxu0 0.0
        %397 = vmatpush1.msra.mxu0 0.0
        %398 = vmatprep.subr.mxu0 0.0
        %399 = vmatpush1.msra.mxu0 0.0
        %400 = vmatprep.subr.mxu0 0.0
        %401 = vmatpush1.msra.mxu0 0.0
        %402 = vmatprep.subr.mxu0 0.0
        %403 = vmatpush1.msra.mxu0 0.0
        %404 = vmatprep.subr.mxu0 0.0
        %405 = vmatpush1.msra.mxu0 0.0
        %406 = vmatprep.subr.mxu0 0.0
        %407 = vmatpush1.msra.mxu0 0.0
        %408 = vmatprep.subr.mxu0 0.0
        %409 = vmatpush1.msra.mxu0 0.0
        %410 = vmatprep.subr.mxu0 0.0
        %411 = vmatpush1.msra.mxu0 0.0
        %412 = vmatprep.subr.mxu0 0.0
        %413 = vmatpush1.msra.mxu0 0.0
        %414 = vmatprep.subr.mxu0 0.0
        %415 = vmatpush1.msra.mxu0 0.0
        %416 = vmatprep.subr.mxu0 0.0
        %417 = vmatpush1.msra.mxu0 0.0
        %418 = vmatprep.subr.mxu0 0.0
        %419 = vmatpush1.msra.mxu0 0.0
        %420 = vmatprep.subr.mxu0 0.0
        %421 = vmatpush1.msra.mxu0 0.0
        %422 = vmatprep.subr.mxu0 0.0
        %423 = vmatpush1.msra.mxu0 0.0
        %424 = vmatprep.subr.mxu0 0.0
        %425 = vmatpush1.msra.mxu0 0.0
        %426 = vmatprep.subr.mxu0 0.0
        %427 = vmatpush1.msra.mxu0 0.0
        %428 = vmatprep.subr.mxu0 0.0
        %429 = vmatpush1.msra.mxu0 0.0
        %430 = vmatprep.subr.mxu0 0.0
        %431 = vmatpush1.msra.mxu0 0.0
        %432 = vmatprep.subr.mxu0 0.0
        %433 = vmatpush1.msra.mxu0 0.0
        %434 = vmatprep.subr.mxu0 0.0
        %435 = vmatpush1.msra.mxu0 0.0
        %436 = vmatprep.subr.mxu0 0.0
        %437 = vmatpush1.msra.mxu0 0.0
        %438 = vmatprep.subr.mxu0 0.0
        %439 = vmatpush1.msra.mxu0 0.0
        %440 = vmatprep.subr.mxu0 0.0
        %441 = vmatpush1.msra.mxu0 0.0
        %442 = vmatprep.subr.mxu0 0.0
        %443 = vmatpush1.msra.mxu0 0.0
        %444 = vmatprep.subr.mxu0 0.0
        %445 = vmatpush1.msra.mxu0 0.0
        %446 = vmatprep.subr.mxu0 0.0
        %447 = vmatpush1.msra.mxu0 0.0
        %448 = vmatprep.subr.mxu0 0.0
        %449 = vmatpush1.msra.mxu0 0.0
        %450 = vmatprep.subr.mxu0 0.0
        %451 = vmatpush1.msra.mxu0 0.0
        %452 = vmatprep.subr.mxu0 0.0
        %453 = vmatpush1.msra.mxu0 0.0
        %454 = vmatprep.mubr.f32.mxu0 0.0
        %455 = vmatmul.mubr.f32.gmra.mrb[0].mxu0 %v388
        %v456 = vpop.f32.mrb[0].mxu0
        %v457 = vadd.f32 %v385, %v456
        %v458 = vpop.f32.mrb[0].mxu0
        %v459 = vadd.f32 %v385, %v458
        %460 = vdwg.mxu0
        %v461 = vmax.f32 %v457, 0.0
        %v462 = vmax.f32 %v459, 0.0
        %s463 = scalar_lea.vmem %s1, 24
        %v464 = vld [vmem:[%s463] sm:$0xff]
        %s465 = scalar_lea.vmem %s2, 24
        %v466 = vld [vmem:[%s465] sm:$0xff]
        %468 = vset.pattern.permute.xlu0 0
        %469 = vperm.xlu0 %468, %v466
        %v470 = vpop.permute.xlu0 %469
        %v473 = vsel %vm216, %v464, 0
        %475 = vmatprep.subr.mxu0 %v462
        %476 = vmatpush1.msra.mxu0 %v461
        %477 = vmatprep.subr.mxu0 0.0
        %478 = vmatpush1.msra.mxu0 0.0
        %479 = vmatprep.subr.mxu0 0.0
        %480 = vmatpush1.msra.mxu0 0.0
        %481 = vmatprep.subr.mxu0 0.0
        %482 = vmatpush1.msra.mxu0 0.0
        %483 = vmatprep.subr.mxu0 0.0
        %484 = vmatpush1.msra.mxu0 0.0
        %485 = vmatprep.subr.mxu0 0.0
        %486 = vmatpush1.msra.mxu0 0.0
        %487 = vmatprep.subr.mxu0 0.0
        %488 = vmatpush1.msra.mxu0 0.0
        %489 = vmatprep.subr.mxu0 0.0
        %490 = vmatpush1.msra.mxu0 0.0
        %491 = vmatprep.subr.mxu0 0.0
        %492 = vmatpush1.msra.mxu0 0.0
        %493 = vmatprep.subr.mxu0 0.0
        %494 = vmatpush1.msra.mxu0 0.0
        %495 = vmatprep.subr.mxu0 0.0
        %496 = vmatpush1.msra.mxu0 0.0
        %497 = vmatprep.subr.mxu0 0.0
        %498 = vmatpush1.msra.mxu0 0.0
        %499 = vmatprep.subr.mxu0 0.0
        %500 = vmatpush1.msra.mxu0 0.0
        %501 = vmatprep.subr.mxu0 0.0
        %502 = vmatpush1.msra.mxu0 0.0
        %503 = vmatprep.subr.mxu0 0.0
        %504 = vmatpush1.msra.mxu0 0.0
        %505 = vmatprep.subr.mxu0 0.0
        %506 = vmatpush1.msra.mxu0 0.0
        %507 = vmatprep.subr.mxu0 0.0
        %508 = vmatpush1.msra.mxu0 0.0
        %509 = vmatprep.subr.mxu0 0.0
        %510 = vmatpush1.msra.mxu0 0.0
        %511 = vmatprep.subr.mxu0 0.0
        %512 = vmatpush1.msra.mxu0 0.0
        %513 = vmatprep.subr.mxu0 0.0
        %514 = vmatpush1.msra.mxu0 0.0
        %515 = vmatprep.subr.mxu0 0.0
        %516 = vmatpush1.msra.mxu0 0.0
        %517 = vmatprep.subr.mxu0 0.0
        %518 = vmatpush1.msra.mxu0 0.0
        %519 = vmatprep.subr.mxu0 0.0
        %520 = vmatpush1.msra.mxu0 0.0
        %521 = vmatprep.subr.mxu0 0.0
        %522 = vmatpush1.msra.mxu0 0.0
        %523 = vmatprep.subr.mxu0 0.0
        %524 = vmatpush1.msra.mxu0 0.0
        %525 = vmatprep.subr.mxu0 0.0
        %526 = vmatpush1.msra.mxu0 0.0
        %527 = vmatprep.subr.mxu0 0.0
        %528 = vmatpush1.msra.mxu0 0.0
        %529 = vmatprep.subr.mxu0 0.0
        %530 = vmatpush1.msra.mxu0 0.0
        %531 = vmatprep.subr.mxu0 0.0
        %532 = vmatpush1.msra.mxu0 0.0
        %533 = vmatprep.subr.mxu0 0.0
        %534 = vmatpush1.msra.mxu0 0.0
        %535 = vmatprep.subr.mxu0 0.0
        %536 = vmatpush1.msra.mxu0 0.0
        %537 = vmatprep.subr.mxu0 0.0
        %538 = vmatpush1.msra.mxu0 0.0
        %539 = vmatprep.mubr.f32.mxu0 0.0
        %540 = vmatmul.mubr.f32.gmra.mrb[0].mxu0 %v473
        %v541 = vpop.f32.mrb[0].mxu0
        %v542 = vadd.f32 %v470, %v541
        %v543 = vpop.f32.mrb[0].mxu0
        %v544 = vadd.f32 %v470, %v543
        %545 = vdwg.mxu0
        %v546 = vmax.f32 %v542, 0.0
        %v547 = vmax.f32 %v544, 0.0
        %s548 = scalar_lea.vmem %s1, 32
        %v549 = vld [vmem:[%s548] sm:$0xff]
        %s550 = scalar_lea.vmem %s2, 32
        %v551 = vld [vmem:[%s550] sm:$0xff]
        %553 = vset.pattern.permute.xlu0 0
        %554 = vperm.xlu0 %553, %v551
        %v555 = vpop.permute.xlu0 %554
        %v558 = vsel %vm216, %v549, 0
        %560 = vmatprep.subr.mxu0 %v547
        %561 = vmatpush1.msra.mxu0 %v546
        %562 = vmatprep.subr.mxu0 0.0
        %563 = vmatpush1.msra.mxu0 0.0
        %564 = vmatprep.subr.mxu0 0.0
        %565 = vmatpush1.msra.mxu0 0.0
        %566 = vmatprep.subr.mxu0 0.0
        %567 = vmatpush1.msra.mxu0 0.0
        %568 = vmatprep.subr.mxu0 0.0
        %569 = vmatpush1.msra.mxu0 0.0
        %570 = vmatprep.subr.mxu0 0.0
        %571 = vmatpush1.msra.mxu0 0.0
        %572 = vmatprep.subr.mxu0 0.0
        %573 = vmatpush1.msra.mxu0 0.0
        %574 = vmatprep.subr.mxu0 0.0
        %575 = vmatpush1.msra.mxu0 0.0
        %576 = vmatprep.subr.mxu0 0.0
        %577 = vmatpush1.msra.mxu0 0.0
        %578 = vmatprep.subr.mxu0 0.0
        %579 = vmatpush1.msra.mxu0 0.0
        %580 = vmatprep.subr.mxu0 0.0
        %581 = vmatpush1.msra.mxu0 0.0
        %582 = vmatprep.subr.mxu0 0.0
        %583 = vmatpush1.msra.mxu0 0.0
        %584 = vmatprep.subr.mxu0 0.0
        %585 = vmatpush1.msra.mxu0 0.0
        %586 = vmatprep.subr.mxu0 0.0
        %587 = vmatpush1.msra.mxu0 0.0
        %588 = vmatprep.subr.mxu0 0.0
        %589 = vmatpush1.msra.mxu0 0.0
        %590 = vmatprep.subr.mxu0 0.0
        %591 = vmatpush1.msra.mxu0 0.0
        %592 = vmatprep.subr.mxu0 0.0
        %593 = vmatpush1.msra.mxu0 0.0
        %594 = vmatprep.subr.mxu0 0.0
        %595 = vmatpush1.msra.mxu0 0.0
        %596 = vmatprep.subr.mxu0 0.0
        %597 = vmatpush1.msra.mxu0 0.0
        %598 = vmatprep.subr.mxu0 0.0
        %599 = vmatpush1.msra.mxu0 0.0
        %600 = vmatprep.subr.mxu0 0.0
        %601 = vmatpush1.msra.mxu0 0.0
        %602 = vmatprep.subr.mxu0 0.0
        %603 = vmatpush1.msra.mxu0 0.0
        %604 = vmatprep.subr.mxu0 0.0
        %605 = vmatpush1.msra.mxu0 0.0
        %606 = vmatprep.subr.mxu0 0.0
        %607 = vmatpush1.msra.mxu0 0.0
        %608 = vmatprep.subr.mxu0 0.0
        %609 = vmatpush1.msra.mxu0 0.0
        %610 = vmatprep.subr.mxu0 0.0
        %611 = vmatpush1.msra.mxu0 0.0
        %612 = vmatprep.subr.mxu0 0.0
        %613 = vmatpush1.msra.mxu0 0.0
        %614 = vmatprep.subr.mxu0 0.0
        %615 = vmatpush1.msra.mxu0 0.0
        %616 = vmatprep.subr.mxu0 0.0
        %617 = vmatpush1.msra.mxu0 0.0
        %618 = vmatprep.subr.mxu0 0.0
        %619 = vmatpush1.msra.mxu0 0.0
        %620 = vmatprep.subr.mxu0 0.0
        %621 = vmatpush1.msra.mxu0 0.0
        %622 = vmatprep.subr.mxu0 0.0
        %623 = vmatpush1.msra.mxu0 0.0
        %624 = vmatprep.mubr.f32.mxu0 0.0
        %625 = vmatmul.mubr.f32.gmra.mrb[0].mxu0 %v558
        %v626 = vpop.f32.mrb[0].mxu0
        %v627 = vadd.f32 %v555, %v626
        %v628 = vpop.f32.mrb[0].mxu0
        %v629 = vadd.f32 %v555, %v628
        %630 = vdwg.mxu0
        %v631 = vmax.f32 %v627, 0.0
        %v632 = vmax.f32 %v629, 0.0
        %s633 = scalar_lea.vmem %s1, 40
        %v634 = vld [vmem:[%s633] sm:$0xff]
        %s635 = scalar_lea.vmem %s2, 40
        %v636 = vld [vmem:[%s635] sm:$0xff]
        %638 = vset.pattern.permute.xlu0 0
        %639 = vperm.xlu0 %638, %v636
        %v640 = vpop.permute.xlu0 %639
        %v643 = vsel %vm216, %v634, 0
        %645 = vmatprep.subr.mxu0 %v632
        %646 = vmatpush1.msra.mxu0 %v631
        %647 = vmatprep.subr.mxu0 0.0
        %648 = vmatpush1.msra.mxu0 0.0
        %649 = vmatprep.subr.mxu0 0.0
        %650 = vmatpush1.msra.mxu0 0.0
        %651 = vmatprep.subr.mxu0 0.0
        %652 = vmatpush1.msra.mxu0 0.0
        %653 = vmatprep.subr.mxu0 0.0
        %654 = vmatpush1.msra.mxu0 0.0
        %655 = vmatprep.subr.mxu0 0.0
        %656 = vmatpush1.msra.mxu0 0.0
        %657 = vmatprep.subr.mxu0 0.0
        %658 = vmatpush1.msra.mxu0 0.0
        %659 = vmatprep.subr.mxu0 0.0
        %660 = vmatpush1.msra.mxu0 0.0
        %661 = vmatprep.subr.mxu0 0.0
        %662 = vmatpush1.msra.mxu0 0.0
        %663 = vmatprep.subr.mxu0 0.0
        %664 = vmatpush1.msra.mxu0 0.0
        %665 = vmatprep.subr.mxu0 0.0
        %666 = vmatpush1.msra.mxu0 0.0
        %667 = vmatprep.subr.mxu0 0.0
        %668 = vmatpush1.msra.mxu0 0.0
        %669 = vmatprep.subr.mxu0 0.0
        %670 = vmatpush1.msra.mxu0 0.0
        %671 = vmatprep.subr.mxu0 0.0
        %672 = vmatpush1.msra.mxu0 0.0
        %673 = vmatprep.subr.mxu0 0.0
        %674 = vmatpush1.msra.mxu0 0.0
        %675 = vmatprep.subr.mxu0 0.0
        %676 = vmatpush1.msra.mxu0 0.0
        %677 = vmatprep.subr.mxu0 0.0
        %678 = vmatpush1.msra.mxu0 0.0
        %679 = vmatprep.subr.mxu0 0.0
        %680 = vmatpush1.msra.mxu0 0.0
        %681 = vmatprep.subr.mxu0 0.0
        %682 = vmatpush1.msra.mxu0 0.0
        %683 = vmatprep.subr.mxu0 0.0
        %684 = vmatpush1.msra.mxu0 0.0
        %685 = vmatprep.subr.mxu0 0.0
        %686 = vmatpush1.msra.mxu0 0.0
        %687 = vmatprep.subr.mxu0 0.0
        %688 = vmatpush1.msra.mxu0 0.0
        %689 = vmatprep.subr.mxu0 0.0
        %690 = vmatpush1.msra.mxu0 0.0
        %691 = vmatprep.subr.mxu0 0.0
        %692 = vmatpush1.msra.mxu0 0.0
        %693 = vmatprep.subr.mxu0 0.0
        %694 = vmatpush1.msra.mxu0 0.0
        %695 = vmatprep.subr.mxu0 0.0
        %696 = vmatpush1.msra.mxu0 0.0
        %697 = vmatprep.subr.mxu0 0.0
        %698 = vmatpush1.msra.mxu0 0.0
        %699 = vmatprep.subr.mxu0 0.0
        %700 = vmatpush1.msra.mxu0 0.0
        %701 = vmatprep.subr.mxu0 0.0
        %702 = vmatpush1.msra.mxu0 0.0
        %703 = vmatprep.subr.mxu0 0.0
        %704 = vmatpush1.msra.mxu0 0.0
        %705 = vmatprep.subr.mxu0 0.0
        %706 = vmatpush1.msra.mxu0 0.0
        %707 = vmatprep.subr.mxu0 0.0
        %708 = vmatpush1.msra.mxu0 0.0
        %709 = vmatprep.mubr.f32.mxu0 0.0
        %710 = vmatmul.mubr.f32.gmra.mrb[0].mxu0 %v643
        %v711 = vpop.f32.mrb[0].mxu0
        %v712 = vadd.f32 %v640, %v711
        %v713 = vpop.f32.mrb[0].mxu0
        %v714 = vadd.f32 %v640, %v713
        %715 = vdwg.mxu0
        %716 = vst [vmem:[%s204] sm:$0xff] %v712
        %717 = vst [vmem:[%s204 + $0x8] sm:$0xff] %v714
        %s718 = sand.u32 %s112, 1
        %s719 = scalar_lea.sflag [#allocation4], %s718
        %s720 = sand.u32 %s112, 1
        %s721 = smul.addr %s720, 16
        %s722 = scalar_lea.vmem [#allocation5], %s721
        // Predicated region
        $region37: #{tpu_custom_call.1} parent=31 // pred_check
          %p723 = pneg %p122
        $region38: #{tpu_custom_call.1} parent=31 // pred_check_branch
          %725 = sbr.rel (%p723) target = $region40
        $region39: #{tpu_custom_call.1} parent=31 // pred_region
          %s726 = smul.u32 2, %s25
          %s728 = ssub.s32 256, 256
          %729 = vsyncadd %s719, %s728
          %s730 = smul.addr %s24, 2
          %s731 = sadd.s32 %s726, %s730
          %s732 = smul.addr %s731, 128
          %s733 = scalar_lea.hbm %s3, %s732
          %s735 = sshll.u32 %s722, 4
          %s736 = int_to_ptr.vmem [resolvable:$true] %s735
          %738 = dma.vmem_to_hbm [thread:$0]  %s736, 256, %s733, %s719
        $region40: #{tpu_custom_call.1} parent=31 // pred_fallthru
          _
      $region32: #{tpu_custom_call.1} parent=5 // pred_fallthru
        _
      %p739 = scmp.le.s32.totalorder 2, %s15
      // Predicated region
      $region41: #{tpu_custom_call.1} parent=5 // pred_check
        %p740 = pneg %p739
      $region42: #{tpu_custom_call.1} parent=5 // pred_check_branch
        %742 = sbr.rel (%p740) target = $region44
      $region43: #{tpu_custom_call.1} parent=5 // pred_region
        %s743 = ssub.s32 %s15, 2
        // Predicated region
        $region45: #{tpu_custom_call.1} parent=43 // pred_check
          %p744 = pneg %p128
        $region46: #{tpu_custom_call.1} parent=43 // pred_check_branch
          %746 = sbr.rel (%p744) target = $region48
        $region47: #{tpu_custom_call.1} parent=43 // pred_region
          %s747 = sand.u32 %s113, 1
          %s748 = scalar_lea.sflag [#allocation4], %s747
          %s749 = sand.u32 %s113, 1
          %s750 = smul.addr %s749, 16
          %s751 = scalar_lea.vmem [#allocation5], %s750
          %752 = dma.done %s748, 256
        $region48: #{tpu_custom_call.1} parent=43 // pred_fallthru
          _
      $region44: #{tpu_custom_call.1} parent=5 // pred_fallthru
        _
    $region6: #{tpu_custom_call.1} parent=1 // loop_footer
      %s19 = sadd.s32 1, %s15
    $region7: #{tpu_custom_call.1} parent=1 // loop_footer_branch
      %14 = sbr.rel target = $region3
    $region8: #{tpu_custom_call.1} parent=1 // loop_exit
      _
    %753 = vsyncpa [#allocation3], 1
    %s754 = scalar_lea.sflag [#allocation3], 1
    %755 = vsyncpa %s754, 1
    %756 = vsyncpa [#allocation4], 1
    %s757 = scalar_lea.sflag [#allocation4], 1
    %758 = vsyncpa %s757, 1

</llo_original>
